<compile_context>
chip_gen: v7x
topology: tpu7x:2x2x1
jax: 0.10.0
libtpu: 0.0.40
codegen_flags: <defaults>
</compile_context>

<pallas_src>
import jax
import jax.numpy as jnp
from jax.experimental import pallas as pl
from jax.experimental.pallas import tpu as pltpu

_MIB = 1 << 20


# ---------------------------------------------------------------------------
# hardware / sizing helpers
# ---------------------------------------------------------------------------
def _round_up(n, m):
    return ((n + m - 1) // m) * m


def _lanes(n):           # lane (last-dim) padding inside VMEM
    return max(_round_up(n, 128), 128)


def _sub8(n):            # sublane (second-to-last-dim) padding inside VMEM
    return max(_round_up(n, 8), 8)


def _tpu_vmem_capacity_bytes():
    try:
        return int(pltpu.get_tpu_info().vmem_capacity_bytes)
    except Exception:
        return 64 << 20          # conservative default = v7x per-TensorCore VMEM


def _num_tensorcores():
    """Best-effort TensorCores-per-chip query (v7x = 2); defaults to 1."""
    try:
        info = pltpu.get_tpu_info()
        for name in ("num_cores", "tensorcore_count", "tensorcores_per_chip",
                     "core_count"):
            v = getattr(info, name, None)
            if v:
                return max(int(v), 1)
    except Exception:
        pass
    try:
        v = getattr(jax.devices()[0], "num_cores", None)
        if v:
            return max(int(v), 1)
    except Exception:
        pass
    return 1


def _pick_row_tile(m_rows, per_row_vmem, fixed_vmem, per_row_out_hbm, row_align=1):
    """Rows per grid step + a footprint-derived vmem_limit_bytes.

    per_row_vmem / fixed_vmem are padding-aware, double-buffered VMEM bytes;
    per_row_out_hbm is the logical HBM output bytes written per row.
    """
    cap = _tpu_vmem_capacity_bytes()
    # Leave headroom for Mosaic-internal scratch and surrounding XLA fusions.
    block_budget = max(cap - 24 * _MIB, cap // 2)
    tr_vmem = max((block_budget - fixed_vmem) // max(per_row_vmem, 1), 1)
    # ~4 MiB of output HBM per step: per-step overhead (~0.35 us) stays <<
    # DMA/compute time and tiled-copy data shows 85%+ of roofline at this size.
    tr_target = max(-(-(4 * _MIB) // max(per_row_out_hbm, 1)), 1)
    # >= 2 steps per TensorCore (4 on dual-core v7x) so "parallel" sharding keeps
    # every core pipelined; 2 steps suffices for DMA in/out overlap on v5e/v6e.
    min_steps = 2 * _num_tensorcores()
    tr_steps = max(m_rows // min_steps, 1)
    tr = max(1, min(tr_vmem, tr_target, tr_steps, m_rows))
    if row_align > 1:
        if tr >= m_rows or m_rows <= row_align:
            tr = m_rows                       # full-dim block is always legal
        else:
            tr = max(row_align, (tr // row_align) * row_align)
    footprint = fixed_vmem + tr * per_row_vmem
    # vmem_limit from the real footprint (+ headroom), never a blanket claim.
    vmem_limit = int(min(cap - 4 * _MIB, max(footprint + 16 * _MIB, 32 * _MIB)))
    return int(tr), vmem_limit


# ---------------------------------------------------------------------------
# kernels
# ---------------------------------------------------------------------------
def _upsample_dense_kernel(x_ref, w_ref, b_ref, o_ref):
    # Dense-small path (2*C_out < 128): one image row per matmul row.
    #   x_ref : (tr, W*C_in)                lane-dense input rows
    #   w_ref : (W*C_in, 2*W*2*C_out)       block-diagonal deconv weights,
    #                                       columns ordered (kh, w, kw, co)
    #   b_ref : (1, 2*W*2*C_out)            bias tiled over (kh, w, kw), fp32
    #   o_ref : (tr, 2*W*2*C_out)           row-major == final output order
    y = jnp.dot(x_ref[...], w_ref[...], preferred_element_type=jnp.float32)
    o_ref[...] = (y + b_ref[...]).astype(o_ref.dtype)       # single unmasked store


def _upsample_fused_merged_kernel(x_ref, w_ref, b_ref, o_ref):
    # Standard path, 2*C_out % 128 == 0: single merged dot, lane-aligned kh slices.
    #   x_ref : (tr*W, C_in)   w_ref : (C_in, 4*C_out) cols=(kh,kw,co)
    #   b_ref : (1, 4*C_out)   o_ref : (tr, 2, W, 2*C_out)
    tr, _, w_pix, two_co = o_ref.shape
    y = jnp.dot(x_ref[...], w_ref[...], preferred_element_type=jnp.float32) + b_ref[...]
    # (tr*W, two_co) -> (tr, W, two_co): leading-dim split only (W % 8 == 0).
    o_ref[:, 0, :, :] = y[:, :two_co].reshape(tr, w_pix, two_co).astype(o_ref.dtype)
    o_ref[:, 1, :, :] = y[:, two_co:].reshape(tr, w_pix, two_co).astype(o_ref.dtype)


def _upsample_fused_twodot_kernel(x_ref, w0_ref, w1_ref, b_ref, o_ref):
    # Standard path, generic 2*C_out: one dot per kh (interleaved dot/store bounds
    # the fp32 live range).
    tr, _, w_pix, two_co = o_ref.shape
    x = x_ref[...]
    b = b_ref[...]
    y0 = jnp.dot(x, w0_ref[...], preferred_element_type=jnp.float32) + b
    o_ref[:, 0, :, :] = y0.reshape(tr, w_pix, two_co).astype(o_ref.dtype)
    y1 = jnp.dot(x, w1_ref[...], preferred_element_type=jnp.float32) + b
    o_ref[:, 1, :, :] = y1.reshape(tr, w_pix, two_co).astype(o_ref.dtype)


def _deconv_matmul_kernel(x_ref, w_ref, b_ref, o_ref):
    acc = jnp.dot(x_ref[...], w_ref[...], preferred_element_type=jnp.float32)
    o_ref[...] = (acc + b_ref[...]).astype(o_ref.dtype)


# ---------------------------------------------------------------------------
# path A: lane-dense small-channel path (2*C_out < 128)
# ---------------------------------------------------------------------------
def _upsample_dense_small(x, w_khwco, bias, B, H, W, C_in, C_out, out_dtype):
    two_co = 2 * C_out
    m_rows = B * H
    wcin = W * C_in
    n_out_cols = 2 * W * two_co                      # (kh, w, kw, co) per image row
    in_item = jnp.dtype(x.dtype).itemsize
    out_item = jnp.dtype(out_dtype).itemsize

    # One matmul row per image row; free row-major reshape.
    x_rows = x.reshape(m_rows, wcin)

    # Block-diagonal weight:
    #   w_big[w*C_in+ci, kh*(W*two_co) + w'*two_co + kw*C_out + co]
    #     = (w == w') * weight[ci, co, kh, kw]
    wk = w_khwco.reshape(C_in, 2, two_co)            # (ci, kh, (kw, co))
    eye_w = jnp.eye(W, dtype=w_khwco.dtype)
    w_big = jnp.einsum("uv,ckj->uckvj", eye_w, wk).reshape(wcin, n_out_cols)
    b_full = jnp.tile(bias.astype(jnp.float32), 4 * W).reshape(1, n_out_cols)

    per_row = (_lanes(wcin) * in_item * 2            # x block, double buffered
               + _lanes(n_out_cols) * out_item * 2   # out block, double buffered
               + _lanes(n_out_cols) * 4)             # fp32 matmul/bias staging
    fixed = (_sub8(wcin) * _lanes(n_out_cols) * in_item * 2   # weight (2 pipeline bufs)
             + 8 * _lanes(n_out_cols) * 4 * 2)                # bias
    tr, vmem_limit = _pick_row_tile(m_rows, per_row, fixed,
                                    2 * W * two_co * out_item, row_align=8)

    # Partial last block: Pallas clips OOB block writes; each output row depends
    # only on its own input row, so padded rows are never observed.
    grid = (pl.cdiv(m_rows, tr),)

    cost = pl.CostEstimate(
        flops=2 * m_rows * wcin * n_out_cols,
        transcendentals=0,
        bytes_accessed=(m_rows * wcin + wcin * n_out_cols) * in_item
                       + n_out_cols * 4 + m_rows * n_out_cols * out_item,
    )

    out = pl.pallas_call(
        _upsample_dense_kernel,
        out_shape=jax.ShapeDtypeStruct((m_rows, n_out_cols), out_dtype),
        grid_spec=pltpu.PrefetchScalarGridSpec(
            num_scalar_prefetch=0,
            grid=grid,
            in_specs=[
                pl.BlockSpec((tr, wcin), lambda i: (i, 0)),
                pl.BlockSpec((wcin, n_out_cols), lambda i: (0, 0)),
                pl.BlockSpec((1, n_out_cols), lambda i: (0, 0)),
            ],
            out_specs=pl.BlockSpec((tr, n_out_cols), lambda i: (i, 0)),
        ),
        compiler_params=pltpu.CompilerParams(
            dimension_semantics=("parallel",),
            vmem_limit_bytes=vmem_limit,
        ),
        cost_estimate=cost,
    )(x_rows, w_big, b_full)

    # Row-major identical: (B*H, (kh, w, kw, co)) == (B, 4*H*W, C_out) — free reshape.
    return out.reshape(B, 4 * H * W, C_out)


# ---------------------------------------------------------------------------
# path B: standard fused path (lane-dense stores once 2*C_out >= 128)
# ---------------------------------------------------------------------------
def _upsample_fused(x, w_khwco, bias, B, H, W, C_in, C_out, out_dtype):
    two_co = 2 * C_out
    m_rows = B * H
    L = H * W
    in_item = jnp.dtype(x.dtype).itemsize
    out_item = jnp.dtype(out_dtype).itemsize

    x_mat = x.reshape(B * L, C_in)                   # rows = pixels in (b, h, w) order
    w0 = w_khwco[:, 0].reshape(C_in, two_co)         # cols = (kw, co), kh = 0
    w1 = w_khwco[:, 1].reshape(C_in, two_co)         # kh = 1
    merged = (two_co % 128 == 0)                     # kh slice of y is lane-tile aligned

    w_cols = 2 * two_co if merged else two_co
    n_w = 1 if merged else 2
    per_row = (W * _lanes(C_in) * in_item * 2                    # x block (tr*W, C_in)
               + 2 * _sub8(W) * _lanes(two_co) * out_item * 2    # out block
               + 2 * W * _lanes(two_co) * 4)                     # fp32 y staging
    fixed = (n_w * _sub8(C_in) * _lanes(w_cols) * in_item * 2    # weights
             + 8 * _lanes(w_cols) * 4 * 2)                       # bias
    tr, vmem_limit = _pick_row_tile(m_rows, per_row, fixed,
                                    2 * W * two_co * out_item, row_align=1)
    grid = (pl.cdiv(m_rows, tr),)

    cost = pl.CostEstimate(
        flops=2 * B * L * C_in * 4 * C_out,
        transcendentals=0,
        bytes_accessed=(B * L * C_in + 2 * C_in * two_co) * in_item
                       + 2 * two_co * 4 + B * L * 4 * C_out * out_item,
    )

    if merged:
        w_cat = jnp.concatenate([w0, w1], axis=1)               # cols = (kh, kw, co)
        b_cat = jnp.tile(bias.astype(jnp.float32), 4).reshape(1, 2 * two_co)
        kernel = _upsample_fused_merged_kernel
        in_specs = [
            pl.BlockSpec((tr * W, C_in), lambda i: (i, 0)),
            pl.BlockSpec((C_in, 2 * two_co), lambda i: (0, 0)),
            pl.BlockSpec((1, 2 * two_co), lambda i: (0, 0)),
        ]
        operands = (x_mat, w_cat, b_cat)
    else:
        b_half = jnp.tile(bias.astype(jnp.float32), 2).reshape(1, two_co)
        kernel = _upsample_fused_twodot_kernel
        in_specs = [
            pl.BlockSpec((tr * W, C_in), lambda i: (i, 0)),
            pl.BlockSpec((C_in, two_co), lambda i: (0, 0)),
            pl.BlockSpec((C_in, two_co), lambda i: (0, 0)),
            pl.BlockSpec((1, two_co), lambda i: (0, 0)),
        ]
        operands = (x_mat, w0, w1, b_half)

    out = pl.pallas_call(
        kernel,
        out_shape=jax.ShapeDtypeStruct((m_rows, 2, W, two_co), out_dtype),
        grid_spec=pltpu.PrefetchScalarGridSpec(
            num_scalar_prefetch=0,
            grid=grid,
            in_specs=in_specs,
            out_specs=pl.BlockSpec((tr, 2, W, two_co), lambda i: (i, 0, 0, 0)),
        ),
        compiler_params=pltpu.CompilerParams(
            dimension_semantics=("parallel",),
            vmem_limit_bytes=vmem_limit,
        ),
        cost_estimate=cost,
    )(*operands)

    # Free row-major reshape: (B*H, 2, W, 2*C_out) == (B, 4*H*W, C_out).
    return out.reshape(B, 4 * H * W, C_out)


# ---------------------------------------------------------------------------
# path C: rare fallback (W % 8 != 0 AND wide channels): matmul + XLA 2x2 scatter
# ---------------------------------------------------------------------------
def _upsample_unfused(x, w_khwco, bias, B, H, W, C_in, C_out, out_dtype):
    L = H * W
    M = B * L
    four_co = 4 * C_out
    in_item = jnp.dtype(x.dtype).itemsize
    out_item = jnp.dtype(out_dtype).itemsize

    x_mat = x.reshape(M, C_in)
    w_mat = w_khwco.reshape(C_in, four_co)                       # cols = (kh, kw, co)
    b_mat = jnp.tile(bias.astype(jnp.float32), 4).reshape(1, four_co)

    per_row = (_lanes(C_in) * in_item * 2 + _lanes(four_co) * out_item * 2
               + _lanes(four_co) * 4)
    fixed = (_sub8(C_in) * _lanes(four_co) * in_item * 2
             + 8 * _lanes(four_co) * 4 * 2)
    tm, vmem_limit = _pick_row_tile(M, per_row, fixed, four_co * out_item, row_align=8)

    y = pl.pallas_call(
        _deconv_matmul_kernel,
        out_shape=jax.ShapeDtypeStruct((M, four_co), out_dtype),
        grid_spec=pltpu.PrefetchScalarGridSpec(
            num_scalar_prefetch=0,
            grid=(pl.cdiv(M, tm),),
            in_specs=[
                pl.BlockSpec((tm, C_in), lambda i: (i, 0)),
                pl.BlockSpec((C_in, four_co), lambda i: (0, 0)),
                pl.BlockSpec((1, four_co), lambda i: (0, 0)),
            ],
            out_specs=pl.BlockSpec((tm, four_co), lambda i: (i, 0)),
        ),
        compiler_params=pltpu.CompilerParams(
            dimension_semantics=("parallel",),
            vmem_limit_bytes=vmem_limit,
        ),
    )(x_mat, w_mat, b_mat)
    y = y.reshape(B, H, W, 2, 2, C_out)
    y = jnp.transpose(y, (0, 1, 3, 2, 4, 5))
    return y.reshape(B, 4 * H * W, C_out)


# ---------------------------------------------------------------------------
# public entry point
# ---------------------------------------------------------------------------
def upsample_forward(x, weight, bias, H, W, out_dtype=None):
    """Forward of EFF_Net.Upsample.

    x:      (B, L, C_in) with L == H*W
    weight: (C_in, C_out, 2, 2)   (PyTorch ConvTranspose2d layout)
    bias:   (C_out,)
    out_dtype: optional output dtype (e.g. bfloat16) — accumulation stays fp32.
    returns (B, 4*H*W, C_out)
    """
    B, L, C_in = x.shape
    assert L == H * W, (L, H, W)
    C_out = weight.shape[1]
    two_co = 2 * C_out
    out_dtype = x.dtype if out_dtype is None else jnp.dtype(out_dtype)
    in_item = jnp.dtype(x.dtype).itemsize

    # channels-last deconv weights; cast to the activation dtype for the MXU
    # (fp32 accumulation kept in-kernel).
    w_khwco = jnp.transpose(weight, (0, 2, 3, 1)).astype(x.dtype)  # (C_in, kh, kw, C_out)

    wcin = W * C_in
    n_out_cols = 2 * W * two_co

    # Path selection:
    #  * dense-small: lane-masked stores would cap throughput at ~two_co/128 of the
    #    vst slot; the block-diagonal trick restores dense stores.  Gate on the big
    #    weight staying small (<= 4 MiB) and the W-fold FLOP inflation staying
    #    clearly under the MXU roofline (wcin <= 1024).
    use_dense_small = (two_co < 128 and wcin * n_out_cols * in_item <= 4 * _MIB
                       and wcin <= 1024)
    if use_dense_small:
        return _upsample_dense_small(x, w_khwco, bias, B, H, W, C_in, C_out, out_dtype)
    if W % 8 == 0:
        return _upsample_fused(x, w_khwco, bias, B, H, W, C_in, C_out, out_dtype)
    # TODO(synk): odd W with wide channels keeps the XLA 2x2-scatter fallback (one
    # extra HBM pass); the fused kernel would need an in-kernel sublane relayout.
    return _upsample_unfused(x, w_khwco, bias, B, H, W, C_in, C_out, out_dtype)


# ---------------------------------------------------------------------------
# pure-JAX reference of the PyTorch module forward (for self-check)
# ---------------------------------------------------------------------------
def _reference_forward(x, weight, bias, H, W):
    B, L, C_in = x.shape
    C_out = weight.shape[1]
    x_nchw = jnp.transpose(x, (0, 2, 1)).reshape(B, C_in, H, W)
    patches = jnp.einsum("bchw,cokl->bohwkl", x_nchw, weight)
    out = jnp.transpose(patches, (0, 1, 2, 4, 3, 5)).reshape(B, C_out, 2 * H, 2 * W)
    out = out + bias[None, :, None, None]
    out = out.reshape(B, C_out, 4 * H * W)
    return jnp.transpose(out, (0, 2, 1))


if __name__ == "__main__":
    B, in_channel, out_channel = 2, 4, 8
    H = W = 16
    L = H * W

    key = jax.random.PRNGKey(0)
    kx, kw, kb = jax.random.split(key, 3)

    x = jax.random.normal(kx, (B, L, in_channel), dtype=jnp.float32)
    fan = in_channel * 2 * 2
    bound = 1.0 / (fan ** 0.5)
    weight = jax.random.uniform(kw, (in_channel, out_channel, 2, 2),
                                minval=-bound, maxval=bound, dtype=jnp.float32)
    bias = jax.random.uniform(kb, (out_channel,),
                              minval=-bound, maxval=bound, dtype=jnp.float32)

    upsample = jax.jit(upsample_forward, static_argnums=(3, 4))
    out = jax.block_until_ready(upsample(x, weight, bias, H, W))

    ref = _reference_forward(x, weight, bias, H, W)
    assert out.shape == (B, 4 * H * W, out_channel), out.shape
    assert jnp.allclose(out, ref, atol=1e-4, rtol=1e-4), "mismatch vs reference"

    print("KERNEL_OK")
</pallas_src>

<mosaic_0001>
module attributes {stable_mosaic.version = 11 : i64} {
  func.func @_upsample_dense_kernel(%arg0: i32, %arg1: memref<16x64xf32, #tpu.memory_space<vmem>>, %arg2: memref<64x512xf32, #tpu.memory_space<vmem>>, %arg3: memref<1x512xf32, #tpu.memory_space<vmem>>, %arg4: memref<16x512xf32, #tpu.memory_space<vmem>>) attributes {dimension_semantics = [#tpu.dimension_semantics<parallel>], iteration_bounds = array<i64: 2>, scalar_prefetch = 0 : i64, scratch_operands = 0 : i64, tpu.core_type = #tpu.core_type<tc>, window_params = [{transform_indices = @transform_0, window_bounds = array<i64: 16, 64>}, {pipeline_mode = #tpu.pipeline_mode<synchronous>, transform_indices = @transform_1, window_bounds = array<i64: 64, 512>}, {pipeline_mode = #tpu.pipeline_mode<synchronous>, transform_indices = @transform_2, window_bounds = array<i64: 1, 512>}, {transform_indices = @transform_3, window_bounds = array<i64: 16, 512>}]} {
    %c0 = arith.constant 0 : index
    %c0_0 = arith.constant 0 : index
    %0 = vector.load %arg1[%c0, %c0_0] : memref<16x64xf32, #tpu.memory_space<vmem>>, vector<16x64xf32>
    %c0_1 = arith.constant 0 : index
    %c0_2 = arith.constant 0 : index
    %1 = vector.load %arg2[%c0_1, %c0_2] : memref<64x512xf32, #tpu.memory_space<vmem>>, vector<64x512xf32>
    %cst = arith.constant dense<0.000000e+00> : vector<16x512xf32>
    %2 = tpu.matmul %0, %1, %cst {dimension_numbers = #tpu.dot_dimension_numbers<[1], [0], [0], [1], [0, 0, 1, 1], [], []>} : vector<16x64xf32>, vector<64x512xf32>, vector<16x512xf32> -> vector<16x512xf32>
    %c0_3 = arith.constant 0 : index
    %c0_4 = arith.constant 0 : index
    %3 = vector.load %arg3[%c0_3, %c0_4] : memref<1x512xf32, #tpu.memory_space<vmem>>, vector<1x512xf32>
    %4 = vector.broadcast %3 : vector<1x512xf32> to vector<16x512xf32>
    %5 = arith.addf %2, %4 : vector<16x512xf32>
    %c0_5 = arith.constant 0 : index
    %c0_6 = arith.constant 0 : index
    %6 = vector.load %arg4[%c0_5, %c0_6] : memref<16x512xf32, #tpu.memory_space<vmem>>, vector<16x512xf32>
    tpu.vector_store %arg4[%c0_5, %c0_6], %5 {strides = array<i32>} : memref<16x512xf32, #tpu.memory_space<vmem>>, vector<16x512xf32>,
    return
  }
  func.func @transform_0(%arg0: i32) -> (i32, i32) {
    %c0_i32 = arith.constant 0 : i32
    %c0_i32_0 = arith.constant 0 : i32
    return %arg0, %c0_i32 : i32, i32
  }
  func.func @transform_1(%arg0: i32) -> (i32, i32) {
    %c0_i32 = arith.constant 0 : i32
    %c0_i32_0 = arith.constant 0 : i32
    %c0_i32_1 = arith.constant 0 : i32
    return %c0_i32, %c0_i32_0 : i32, i32
  }
  func.func @transform_2(%arg0: i32) -> (i32, i32) {
    %c0_i32 = arith.constant 0 : i32
    %c0_i32_0 = arith.constant 0 : i32
    %c0_i32_1 = arith.constant 0 : i32
    return %c0_i32, %c0_i32_0 : i32, i32
  }
  func.func @transform_3(%arg0: i32) -> (i32, i32) {
    %c0_i32 = arith.constant 0 : i32
    %c0_i32_0 = arith.constant 0 : i32
    return %arg0, %c0_i32 : i32, i32
  }
}

</mosaic_0001>

<llo_original>
// kernel: tile.8
$region0: #{tile.8}
  #allocation0 [shape = 's32[1]{0}', space=sflag, size = 0x4, scoped, tag = 'scoped memory for tile.8']
  %s0 = inlined_call_operand.vmem [shape: f32[8], index: 0, kind: input, shape index: {}]
  %s1 = inlined_call_operand.vmem [shape: f32[64,8], index: 1, kind: output, shape index: {}]
  // Predicated region
  $region2: #{tile.8} parent=0 // pred_check
    _
  $region3: #{tile.8} parent=0 // pred_check_branch
    %3 = sbr.rel (0) target = $region5
  $region4: #{tile.8} parent=0 // pred_region
    _
  $region5: #{tile.8} parent=0 // pred_fallthru
    _
  %v4 = vld [vmem:[%s0] ss:$0 sm:$0xff]
  %5 = vst [vmem:[%s1] sm:$0xff] %v4
  %s6 = scalar_lea.vmem %s1, 8
  %7 = vst [vmem:[%s6] sm:$0xff] %v4
  %s8 = scalar_lea.vmem %s1, 16
  %9 = vst [vmem:[%s8] sm:$0xff] %v4
  %s10 = scalar_lea.vmem %s1, 24
  %11 = vst [vmem:[%s10] sm:$0xff] %v4
  %s12 = scalar_lea.vmem %s1, 32
  %13 = vst [vmem:[%s12] sm:$0xff] %v4
  %s14 = scalar_lea.vmem %s1, 40
  %15 = vst [vmem:[%s14] sm:$0xff] %v4
  %s16 = scalar_lea.vmem %s1, 48
  %17 = vst [vmem:[%s16] sm:$0xff] %v4
  %s18 = scalar_lea.vmem %s1, 56
  %19 = vst [vmem:[%s18] sm:$0xff] %v4

// kernel: tile.9
$region0: #{tile.9}
  %s0 = inlined_call_operand.vmem [shape: f32[64,8], index: 0, kind: input, shape index: {}]
  %s1 = inlined_call_operand.vmem [shape: f32[1,512], index: 1, kind: output, shape index: {}]
  $region1: #{tile.9} parent=0
    #allocation0 [shape = 'u8[16384]{0}', space=vmem, size = 0x4000, scoped, tag = 'scoped mem for output reshape']
    %s2 = smov 3
    %v3 = vld [vmem:[%s0] ss:$16 sm:%s2]
    %s4 = smov 12
    %v5 = vld [vmem:[%s0] ss:$16 sm:%s4]
    %vm6 = vcmask 1043458
    %v7 = vsel %vm6, %v5, %v3
    %vm8 = vcmask 64512
    %9 = vst.msk [vmem:[#allocation0] ss:$8 sm:$0xf] %vm8, %v7
    %s10 = scalar_lea.vmem %s0, 15
    %s11 = smov 3
    %v12 = vld [vmem:[%s10] ss:$16 sm:%s11]
    %s13 = scalar_lea.vmem %s0, 15
    %s14 = smov 12
    %v15 = vld [vmem:[%s13] ss:$16 sm:%s14]
    %vm16 = vcmask 1043458
    %v17 = vsel %vm16, %v15, %v12
    %18 = vrot.lane.b32.xlu0 %v17, 120
    %v19 = vpop.permute.xlu0 %18
    %vm20 = vcmask 1048512
    %21 = vst.msk [vmem:[#allocation0] ss:$8 sm:$0xf] %vm20, %v19
    %s22 = scalar_lea.vmem %s0, 14
    %s23 = smov 3
    %v24 = vld [vmem:[%s22] ss:$16 sm:%s23]
    %s25 = scalar_lea.vmem %s0, 14
    %s26 = smov 12
    %v27 = vld [vmem:[%s25] ss:$16 sm:%s26]
    %vm28 = vcmask 1043458
    %v29 = vsel %vm28, %v27, %v24
    %30 = vrot.lane.b32.xlu0 %v29, 112
    %v31 = vpop.permute.xlu0 %30
    %vm32 = vcmask 982912
    %33 = vst.msk [vmem:[#allocation0] ss:$8 sm:$0xf] %vm32, %v31
    %s34 = scalar_lea.vmem %s0, 13
    %s35 = smov 3
    %v36 = vld [vmem:[%s34] ss:$16 sm:%s35]
    %s37 = scalar_lea.vmem %s0, 13
    %s38 = smov 12
    %v39 = vld [vmem:[%s37] ss:$16 sm:%s38]
    %vm40 = vcmask 1043458
    %v41 = vsel %vm40, %v39, %v36
    %42 = vrot.lane.b32.xlu0 %v41, 104
    %v43 = vpop.permute.xlu0 %42
    %vm44 = vcmask 917312
    %45 = vst.msk [vmem:[#allocation0] ss:$8 sm:$0xf] %vm44, %v43
    %s46 = scalar_lea.vmem %s0, 12
    %s47 = smov 3
    %v48 = vld [vmem:[%s46] ss:$16 sm:%s47]
    %s49 = scalar_lea.vmem %s0, 12
    %s50 = smov 12
    %v51 = vld [vmem:[%s49] ss:$16 sm:%s50]
    %vm52 = vcmask 1043458
    %v53 = vsel %vm52, %v51, %v48
    %54 = vrot.lane.b32.xlu0 %v53, 96
    %v55 = vpop.permute.xlu0 %54
    %vm56 = vcmask 851712
    %57 = vst.msk [vmem:[#allocation0] ss:$8 sm:$0xf] %vm56, %v55
    %s58 = scalar_lea.vmem %s0, 11
    %s59 = smov 3
    %v60 = vld [vmem:[%s58] ss:$16 sm:%s59]
    %s61 = scalar_lea.vmem %s0, 11
    %s62 = smov 12
    %v63 = vld [vmem:[%s61] ss:$16 sm:%s62]
    %vm64 = vcmask 1043458
    %v65 = vsel %vm64, %v63, %v60
    %66 = vrot.lane.b32.xlu0 %v65, 88
    %v67 = vpop.permute.xlu0 %66
    %vm68 = vcmask 786112
    %69 = vst.msk [vmem:[#allocation0] ss:$8 sm:$0xf] %vm68, %v67
    %s70 = scalar_lea.vmem %s0, 10
    %s71 = smov 3
    %v72 = vld [vmem:[%s70] ss:$16 sm:%s71]
    %s73 = scalar_lea.vmem %s0, 10
    %s74 = smov 12
    %v75 = vld [vmem:[%s73] ss:$16 sm:%s74]
    %vm76 = vcmask 1043458
    %v77 = vsel %vm76, %v75, %v72
    %78 = vrot.lane.b32.xlu0 %v77, 80
    %v79 = vpop.permute.xlu0 %78
    %vm80 = vcmask 720512
    %81 = vst.msk [vmem:[#allocation0] ss:$8 sm:$0xf] %vm80, %v79
    %s82 = scalar_lea.vmem %s0, 9
    %s83 = smov 3
    %v84 = vld [vmem:[%s82] ss:$16 sm:%s83]
    %s85 = scalar_lea.vmem %s0, 9
    %s86 = smov 12
    %v87 = vld [vmem:[%s85] ss:$16 sm:%s86]
    %vm88 = vcmask 1043458
    %v89 = vsel %vm88, %v87, %v84
    %90 = vrot.lane.b32.xlu0 %v89, 72
    %v91 = vpop.permute.xlu0 %90
    %vm92 = vcmask 654912
    %93 = vst.msk [vmem:[#allocation0] ss:$8 sm:$0xf] %vm92, %v91
    %s94 = scalar_lea.vmem %s0, 8
    %s95 = smov 3
    %v96 = vld [vmem:[%s94] ss:$16 sm:%s95]
    %s97 = scalar_lea.vmem %s0, 8
    %s98 = smov 12
    %v99 = vld [vmem:[%s97] ss:$16 sm:%s98]
    %vm100 = vcmask 1043458
    %v101 = vsel %vm100, %v99, %v96
    %102 = vrot.lane.b32.xlu0 %v101, 64
    %v103 = vpop.permute.xlu0 %102
    %vm104 = vcmask 589312
    %105 = vst.msk [vmem:[#allocation0] ss:$8 sm:$0xf] %vm104, %v103
    %s106 = scalar_lea.vmem %s0, 7
    %s107 = smov 3
    %v108 = vld [vmem:[%s106] ss:$16 sm:%s107]
    %s109 = scalar_lea.vmem %s0, 7
    %s110 = smov 12
    %v111 = vld [vmem:[%s109] ss:$16 sm:%s110]
    %vm112 = vcmask 1043458
    %v113 = vsel %vm112, %v111, %v108
    %114 = vrot.lane.b32.xlu0 %v113, 56
    %v115 = vpop.permute.xlu0 %114
    %vm116 = vcmask 523712
    %117 = vst.msk [vmem:[#allocation0] ss:$8 sm:$0xf] %vm116, %v115
    %s118 = scalar_lea.vmem %s0, 6
    %s119 = smov 3
    %v120 = vld [vmem:[%s118] ss:$16 sm:%s119]
    %s121 = scalar_lea.vmem %s0, 6
    %s122 = smov 12
    %v123 = vld [vmem:[%s121] ss:$16 sm:%s122]
    %vm124 = vcmask 1043458
    %v125 = vsel %vm124, %v123, %v120
    %126 = vrot.lane.b32.xlu0 %v125, 48
    %v127 = vpop.permute.xlu0 %126
    %vm128 = vcmask 458112
    %129 = vst.msk [vmem:[#allocation0] ss:$8 sm:$0xf] %vm128, %v127
    %s130 = scalar_lea.vmem %s0, 5
    %s131 = smov 3
    %v132 = vld [vmem:[%s130] ss:$16 sm:%s131]
    %s133 = scalar_lea.vmem %s0, 5
    %s134 = smov 12
    %v135 = vld [vmem:[%s133] ss:$16 sm:%s134]
    %vm136 = vcmask 1043458
    %v137 = vsel %vm136, %v135, %v132
    %138 = vrot.lane.b32.xlu0 %v137, 40
    %v139 = vpop.permute.xlu0 %138
    %vm140 = vcmask 392512
    %141 = vst.msk [vmem:[#allocation0] ss:$8 sm:$0xf] %vm140, %v139
    %s142 = scalar_lea.vmem %s0, 4
    %s143 = smov 3
    %v144 = vld [vmem:[%s142] ss:$16 sm:%s143]
    %s145 = scalar_lea.vmem %s0, 4
    %s146 = smov 12
    %v147 = vld [vmem:[%s145] ss:$16 sm:%s146]
    %vm148 = vcmask 1043458
    %v149 = vsel %vm148, %v147, %v144
    %150 = vrot.lane.b32.xlu0 %v149, 32
    %v151 = vpop.permute.xlu0 %150
    %vm152 = vcmask 326912
    %153 = vst.msk [vmem:[#allocation0] ss:$8 sm:$0xf] %vm152, %v151
    %s154 = scalar_lea.vmem %s0, 3
    %s155 = smov 3
    %v156 = vld [vmem:[%s154] ss:$16 sm:%s155]
    %s157 = scalar_lea.vmem %s0, 3
    %s158 = smov 12
    %v159 = vld [vmem:[%s157] ss:$16 sm:%s158]
    %vm160 = vcmask 1043458
    %v161 = vsel %vm160, %v159, %v156
    %162 = vrot.lane.b32.xlu0 %v161, 24
    %v163 = vpop.permute.xlu0 %162
    %vm164 = vcmask 261312
    %165 = vst.msk [vmem:[#allocation0] ss:$8 sm:$0xf] %vm164, %v163
    %s166 = scalar_lea.vmem %s0, 2
    %s167 = smov 3
    %v168 = vld [vmem:[%s166] ss:$16 sm:%s167]
    %s169 = scalar_lea.vmem %s0, 2
    %s170 = smov 12
    %v171 = vld [vmem:[%s169] ss:$16 sm:%s170]
    %vm172 = vcmask 1043458
    %v173 = vsel %vm172, %v171, %v168
    %174 = vrot.lane.b32.xlu0 %v173, 16
    %v175 = vpop.permute.xlu0 %174
    %vm176 = vcmask 195712
    %177 = vst.msk [vmem:[#allocation0] ss:$8 sm:$0xf] %vm176, %v175
    %s178 = scalar_lea.vmem %s0, 1
    %s179 = smov 3
    %v180 = vld [vmem:[%s178] ss:$16 sm:%s179]
    %s181 = scalar_lea.vmem %s0, 1
    %s182 = smov 12
    %v183 = vld [vmem:[%s181] ss:$16 sm:%s182]
    %vm184 = vcmask 1043458
    %v185 = vsel %vm184, %v183, %v180
    %186 = vrot.lane.b32.xlu0 %v185, 8
    %v187 = vpop.permute.xlu0 %186
    %vm188 = vcmask 130112
    %189 = vst.msk [vmem:[#allocation0] ss:$8 sm:$0xf] %vm188, %v187
    %s191 = sshllo.u32 0, 1
    %v193 = vld [vmem:[#allocation0] sm:%s191]
    %s194 = sshllo.u32 0, 1
    %195 = vst [vmem:[%s1] sm:%s194] %v193
    %s196 = scalar_lea.vmem [#allocation0], 8
    %v197 = vld [vmem:[%s196] sm:%s191]
    %s198 = sshllo.u32 0, 1
    %s199 = scalar_lea.vmem %s1, 1
    %200 = vst [vmem:[%s199] sm:%s198] %v197
    %s201 = scalar_lea.vmem [#allocation0], 16
    %v202 = vld [vmem:[%s201] sm:%s191]
    %s203 = sshllo.u32 0, 1
    %s204 = smul.addr 1, 2
    %s205 = scalar_lea.vmem %s1, %s204
    %206 = vst [vmem:[%s205] sm:%s203] %v202
    %s207 = scalar_lea.vmem [#allocation0], 24
    %v208 = vld [vmem:[%s207] sm:%s191]
    %s209 = sshllo.u32 0, 1
    %s210 = smul.addr 1, 3
    %s211 = scalar_lea.vmem %s1, %s210
    %212 = vst [vmem:[%s211] sm:%s209] %v208

// kernel: upsample_forward.1
$region0: #{upsample_forward.1}
  #allocation0 [shape = 'u32[]', space=smem, size = 0x4, offset = 0x4, fixed_abs, tag = 'smem constant byte address 0x4 - core index']
  #allocation1 [shape = 'u32[144,128]{1,0:T(1,128)}', space=vmem, size = 0x12000, scoped, tag = 'internal scratch']
  %s0 = inlined_call_operand.vmem [shape: f32[32,64], index: 0, kind: input, shape index: {}]
  %s1 = inlined_call_operand.vmem [shape: f32[64,512], index: 1, kind: input, shape index: {}]
  %s2 = inlined_call_operand.vmem [shape: f32[1,512], index: 2, kind: input, shape index: {}]
  %s3 = inlined_call_operand.vmem [shape: f32[32,512], index: 3, kind: output, shape index: {}]
  %s4 = sld [smem:[#allocation0]]
  $region45: #{upsample_forward.1} parent=0
    _
  %s6 = ssub.s32 1, %s4
  %s7 = scalar_select 0, %s6, %s4
  loop: start=0, step=1, limit=4
  $region2: #{upsample_forward.1} parent=0 // loop_pre_header
    _
  $region3: #{upsample_forward.1} parent=0 // loop_header
    %s9 = sphi 0, %s13
    %p10 = scmp.ge.s32.totalorder %s9, 4
    %s19 = sphi 0, %s21
    %s22 = sphi 0, %s19
    %s23 = sphi 0, %s22
    %s39 = sphi 0, %s23
    %s43 = sphi 0, %s43
    %s45 = sphi 0, %s43
    %s46 = sphi 0, %s45
    %s60 = sphi 0, %s46
    %s64 = sphi 0, %s64
    %s66 = sphi 0, %s64
    %s67 = sphi 0, %s66
    %s81 = sphi 0, %s67
    %s87 = sphi 0, %s89
    %s90 = sphi 0, %s87
    %s91 = sphi 0, %s90
    %s107 = sphi 0, %s91
  $region4: #{upsample_forward.1} parent=0 // loop_header_branch
    %12 = sbr.rel (%p10) target = $region8
  $region5: #{upsample_forward.1} parent=0 // loop_body
    %s14 = ssub.s32 %s9, 1
    %s15 = ssub.s32 %s9, 2
    %s16 = sadd.s32 %s9, 1
    %s17 = ssub.s32 %s9, %s16
    %p18 = scmp.eq.s32.totalorder %s17, 0
    %s20 = sadd.s32 %s19, 1
    %s21 = scalar_select %p18, %s19, %s20
    %p24 = pneg %p18
    %p25 = scmp.eq.s32.totalorder %s9, 1
    %p26 = por %p24, %p25
    %p27 = scmp.ne.s32.totalorder %s19, %s22
    %p28 = scmp.eq.s32.totalorder %s9, 0
    %p29 = por %p27, %p28
    %p30 = scmp.ne.s32.totalorder %s19, %s22
    %p31 = scmp.eq.s32.totalorder %s14, 1
    %p32 = por %p30, %p31
    %p33 = scmp.ne.s32.totalorder %s22, %s23
    %p34 = scmp.eq.s32.totalorder %s14, 0
    %p35 = por %p33, %p34
    %p36 = scmp.ne.s32.totalorder %s22, %s23
    %p37 = scmp.eq.s32.totalorder %s15, 1
    %p38 = por %p36, %p37
    %p40 = scmp.ne.s32.totalorder %s23, %s39
    %p41 = scmp.eq.s32.totalorder %s15, 0
    %p42 = por %p40, %p41
    %s44 = sadd.s32 %s43, 1
    %p47 = scmp.eq.s32.totalorder %s9, 1
    %p48 = scmp.ne.s32.totalorder %s43, %s45
    %p49 = scmp.eq.s32.totalorder %s9, 0
    %p50 = por %p48, %p49
    %p51 = scmp.ne.s32.totalorder %s43, %s45
    %p52 = scmp.eq.s32.totalorder %s14, 1
    %p53 = por %p51, %p52
    %p54 = scmp.ne.s32.totalorder %s45, %s46
    %p55 = scmp.eq.s32.totalorder %s14, 0
    %p56 = por %p54, %p55
    %p57 = scmp.ne.s32.totalorder %s45, %s46
    %p58 = scmp.eq.s32.totalorder %s15, 1
    %p59 = por %p57, %p58
    %p61 = scmp.ne.s32.totalorder %s46, %s60
    %p62 = scmp.eq.s32.totalorder %s15, 0
    %p63 = por %p61, %p62
    %s65 = sadd.s32 %s64, 1
    %p68 = scmp.eq.s32.totalorder %s9, 1
    %p69 = scmp.ne.s32.totalorder %s64, %s66
    %p70 = scmp.eq.s32.totalorder %s9, 0
    %p71 = por %p69, %p70
    %p72 = scmp.ne.s32.totalorder %s64, %s66
    %p73 = scmp.eq.s32.totalorder %s14, 1
    %p74 = por %p72, %p73
    %p75 = scmp.ne.s32.totalorder %s66, %s67
    %p76 = scmp.eq.s32.totalorder %s14, 0
    %p77 = por %p75, %p76
    %p78 = scmp.ne.s32.totalorder %s66, %s67
    %p79 = scmp.eq.s32.totalorder %s15, 1
    %p80 = por %p78, %p79
    %p82 = scmp.ne.s32.totalorder %s67, %s81
    %p83 = scmp.eq.s32.totalorder %s15, 0
    %p84 = por %p82, %p83
    %s85 = ssub.s32 %s9, %s16
    %p86 = scmp.eq.s32.totalorder %s85, 0
    %s88 = sadd.s32 %s87, 1
    %s89 = scalar_select %p86, %s87, %s88
    %p92 = pneg %p86
    %p93 = scmp.eq.s32.totalorder %s9, 1
    %p94 = por %p92, %p93
    %p95 = scmp.ne.s32.totalorder %s87, %s90
    %p96 = scmp.eq.s32.totalorder %s9, 0
    %p97 = por %p95, %p96
    %p98 = scmp.ne.s32.totalorder %s87, %s90
    %p99 = scmp.eq.s32.totalorder %s14, 1
    %p100 = por %p98, %p99
    %p101 = scmp.ne.s32.totalorder %s90, %s91
    %p102 = scmp.eq.s32.totalorder %s14, 0
    %p103 = por %p101, %p102
    %p104 = scmp.ne.s32.totalorder %s90, %s91
    %p105 = scmp.eq.s32.totalorder %s15, 1
    %p106 = por %p104, %p105
    %p108 = scmp.ne.s32.totalorder %s91, %s107
    %p109 = scmp.eq.s32.totalorder %s15, 0
    %p110 = por %p108, %p109
    %p111 = scmp.le.s32.totalorder 1, %s9
    %p112 = scmp.lt.s32.totalorder %s9, 3
    %p113 = pnand %p111, %p112
    %p114 = pneg %p113
    // Predicated region
    $region9: #{upsample_forward.1} parent=5 // pred_check
      _
    $region10: #{upsample_forward.1} parent=5 // pred_check_branch
      %116 = sbr.rel (%p113) target = $region12
    $region11: #{upsample_forward.1} parent=5 // pred_region
      %s117 = ssub.s32 %s9, 1
      // Predicated region
      $region13: #{upsample_forward.1} parent=11 // pred_check
        %p118 = pneg %p56
      $region14: #{upsample_forward.1} parent=11 // pred_check_branch
        %120 = sbr.rel (%p118) target = $region16
      $region15: #{upsample_forward.1} parent=11 // pred_region
        _
      $region16: #{upsample_forward.1} parent=11 // pred_fallthru
        _
      // Predicated region
      $region17: #{upsample_forward.1} parent=11 // pred_check
        %p121 = pneg %p77
      $region18: #{upsample_forward.1} parent=11 // pred_check_branch
        %123 = sbr.rel (%p121) target = $region20
      $region19: #{upsample_forward.1} parent=11 // pred_region
        _
      $region20: #{upsample_forward.1} parent=11 // pred_fallthru
        _
    $region12: #{upsample_forward.1} parent=5 // pred_fallthru
      _
    %p124 = scmp.lt.s32.totalorder %s9, 2
    // Predicated region
    $region21: #{upsample_forward.1} parent=5 // pred_check
      %p125 = pneg %p124
    $region22: #{upsample_forward.1} parent=5 // pred_check_branch
      %127 = sbr.rel (%p125) target = $region24
    $region23: #{upsample_forward.1} parent=5 // pred_region
      // Predicated region
      $region25: #{upsample_forward.1} parent=23 // pred_check
        %p128 = pneg %p29
      $region26: #{upsample_forward.1} parent=23 // pred_check_branch
        %130 = sbr.rel (%p128) target = $region28
      $region27: #{upsample_forward.1} parent=23 // pred_region
        %s131 = smul.u32 2, %s9
        %p132 = scmp.lt.s32.totalorder %s131, 3
        %s133 = scalar_select %p132, %s131, 3
        %s134 = smul.addr %s133, 8
        %s135 = scalar_lea.vmem %s0, %s134
        %s136 = smul.u32 2, %s9
      $region28: #{upsample_forward.1} parent=23 // pred_fallthru
        _
    $region24: #{upsample_forward.1} parent=5 // pred_fallthru
      _
    %p137 = scmp.le.s32.totalorder 1, %s9
    %p138 = scmp.lt.s32.totalorder %s9, 3
    %p139 = pnand %p137, %p138
    %p140 = pneg %p139
    // Predicated region
    $region29: #{upsample_forward.1} parent=5 // pred_check
      _
    $region30: #{upsample_forward.1} parent=5 // pred_check_branch
      %142 = sbr.rel (%p139) target = $region32
    $region31: #{upsample_forward.1} parent=5 // pred_region
      %s143 = ssub.s32 %s9, 1
      %s144 = smul.u32 2, %s14
      %p145 = scmp.lt.s32.totalorder %s144, 3
      %s146 = scalar_select %p145, %s144, 3
      %s147 = smul.addr %s146, 8
      %s148 = scalar_lea.vmem %s0, %s147
      %p149 = pneg %p35
      %p150 = pneg %p32
      %p151 = pneg %p56
      %p152 = pneg %p53
      %p153 = pneg %p77
      %p154 = pneg %p74
      %p155 = pneg %p103
      %p156 = pneg %p100
      %s157 = smul.u32 2, %s14
      %p158 = scmp.lt.s32.totalorder %s157, 3
      %s159 = scalar_select %p158, %s157, 3
      %s160 = smul.addr %s159, 4
      %s161 = smul.addr %s160, 8
      %s162 = scalar_lea.vmem %s3, %s161
      %s163 = smul.u32 2, %s14
      %p164 = scmp.lt.s32.totalorder %s163, 3
      %s165 = scalar_select %p164, %s163, 3
      %s166 = smul.addr %s165, 8
      %s167 = scalar_lea.vmem %s0, %s166
      %s168 = smul.u32 2, %s14
      %s169 = smul.u32 2, %s14
      %p170 = scmp.lt.s32.totalorder %s169, 3
      %s171 = scalar_select %p170, %s169, 3
      %s172 = smul.addr %s171, 4
      %s173 = smul.addr %s172, 8
      %s174 = scalar_lea.vmem %s3, %s173
      %s175 = smul.u32 2, %s14
      %v176 = vld [vmem:[%s167] sm:$0xff]
      %v177 = vld [vmem:[%s167 + $0x8] sm:$0xff]
      %v178 = vld [vmem:[%s1] sm:$0xff]
      %v179 = vld [vmem:[%s1 + $0x8] sm:$0xff]
      %v180 = vld [vmem:[%s1 + $0x10] sm:$0xff]
      %v181 = vld [vmem:[%s1 + $0x18] sm:$0xff]
      %v182 = vld [vmem:[%s1 + $0x20] sm:$0xff]
      %v183 = vld [vmem:[%s1 + $0x28] sm:$0xff]
      %v184 = vld [vmem:[%s1 + $0x30] sm:$0xff]
      %v185 = vld [vmem:[%s1 + $0x38] sm:$0xff]
      %v186 = vld [vmem:[%s1 + $0x40] sm:$0xff]
      %v187 = vld [vmem:[%s1 + $0x48] sm:$0xff]
      %v188 = vld [vmem:[%s1 + $0x50] sm:$0xff]
      %v189 = vld [vmem:[%s1 + $0x58] sm:$0xff]
      %v190 = vld [vmem:[%s1 + $0x60] sm:$0xff]
      %v191 = vld [vmem:[%s1 + $0x68] sm:$0xff]
      %v192 = vld [vmem:[%s1 + $0x70] sm:$0xff]
      %v193 = vld [vmem:[%s1 + $0x78] sm:$0xff]
      %v194 = vld [vmem:[%s1 + $0x80] sm:$0xff]
      %v195 = vld [vmem:[%s1 + $0x88] sm:$0xff]
      %v196 = vld [vmem:[%s1 + $0x90] sm:$0xff]
      %v197 = vld [vmem:[%s1 + $0x98] sm:$0xff]
      %v198 = vld [vmem:[%s1 + $0xa0] sm:$0xff]
      %v199 = vld [vmem:[%s1 + $0xa8] sm:$0xff]
      %v200 = vld [vmem:[%s1 + $0xb0] sm:$0xff]
      %v201 = vld [vmem:[%s1 + $0xb8] sm:$0xff]
      %v202 = vld [vmem:[%s1 + $0xc0] sm:$0xff]
      %v203 = vld [vmem:[%s1 + $0xc8] sm:$0xff]
      %v204 = vld [vmem:[%s1 + $0xd0] sm:$0xff]
      %v205 = vld [vmem:[%s1 + $0xd8] sm:$0xff]
      %v206 = vld [vmem:[%s1 + $0xe0] sm:$0xff]
      %v207 = vld [vmem:[%s1 + $0xe8] sm:$0xff]
      %v208 = vld [vmem:[%s1 + $0xf0] sm:$0xff]
      %v209 = vld [vmem:[%s1 + $0xf8] sm:$0xff]
      %v210 = vld [vmem:[%s2] sm:$0xf]
      %v212 = vlaneseq
      %v213 = vshrl.u32 %v212, 7
      %v214 = vsub.s32 0, %v213
      %v215 = vrot.slane %v210, %v214
      %v216 = vlaneseq
      %v217 = vshrl.u32 %v216, 7
      %v218 = vsub.s32 1, %v217
      %v219 = vrot.slane %v210, %v218
      %v220 = vlaneseq
      %v221 = vshrl.u32 %v220, 7
      %v222 = vsub.s32 2, %v221
      %v223 = vrot.slane %v210, %v222
      %v224 = vlaneseq
      %v225 = vshrl.u32 %v224, 7
      %v226 = vsub.s32 3, %v225
      %v227 = vrot.slane %v210, %v226
      %vm232 = vcmask 523264
      %v234 = vsel %vm232, %v176, 0
      %v237 = vsel %vm232, %v177, 0
      %239 = vmatprep.subr.mxu0 %v179
      %240 = vmatpush1.msra.mxu0 %v178
      %241 = vmatprep.subr.mxu0 %v183
      %242 = vmatpush1.msra.mxu0 %v182
      %243 = vmatprep.subr.mxu0 %v187
      %244 = vmatpush1.msra.mxu0 %v186
      %245 = vmatprep.subr.mxu0 %v191
      %246 = vmatpush1.msra.mxu0 %v190
      %247 = vmatprep.subr.mxu0 %v195
      %248 = vmatpush1.msra.mxu0 %v194
      %249 = vmatprep.subr.mxu0 %v199
      %250 = vmatpush1.msra.mxu0 %v198
      %251 = vmatprep.subr.mxu0 %v203
      %252 = vmatpush1.msra.mxu0 %v202
      %253 = vmatprep.subr.mxu0 %v207
      %254 = vmatpush1.msra.mxu0 %v206
      %255 = vmatprep.subr.mxu0 0.0
      %256 = vmatpush1.msra.mxu0 0.0
      %257 = vmatprep.subr.mxu0 0.0
      %258 = vmatpush1.msra.mxu0 0.0
      %259 = vmatprep.subr.mxu0 0.0
      %260 = vmatpush1.msra.mxu0 0.0
      %261 = vmatprep.subr.mxu0 0.0
      %262 = vmatpush1.msra.mxu0 0.0
      %263 = vmatprep.subr.mxu0 0.0
      %264 = vmatpush1.msra.mxu0 0.0
      %265 = vmatprep.subr.mxu0 0.0
      %266 = vmatpush1.msra.mxu0 0.0
      %267 = vmatprep.subr.mxu0 0.0
      %268 = vmatpush1.msra.mxu0 0.0
      %269 = vmatprep.subr.mxu0 0.0
      %270 = vmatpush1.msra.mxu0 0.0
      %271 = vmatprep.subr.mxu0 0.0
      %272 = vmatpush1.msra.mxu0 0.0
      %273 = vmatprep.subr.mxu0 0.0
      %274 = vmatpush1.msra.mxu0 0.0
      %275 = vmatprep.subr.mxu0 0.0
      %276 = vmatpush1.msra.mxu0 0.0
      %277 = vmatprep.subr.mxu0 0.0
      %278 = vmatpush1.msra.mxu0 0.0
      %279 = vmatprep.subr.mxu0 0.0
      %280 = vmatpush1.msra.mxu0 0.0
      %281 = vmatprep.subr.mxu0 0.0
      %282 = vmatpush1.msra.mxu0 0.0
      %283 = vmatprep.subr.mxu0 0.0
      %284 = vmatpush1.msra.mxu0 0.0
      %285 = vmatprep.subr.mxu0 0.0
      %286 = vmatpush1.msra.mxu0 0.0
      %287 = vmatprep.subr.mxu0 0.0
      %288 = vmatpush1.msra.mxu0 0.0
      %289 = vmatprep.subr.mxu0 0.0
      %290 = vmatpush1.msra.mxu0 0.0
      %291 = vmatprep.subr.mxu0 0.0
      %292 = vmatpush1.msra.mxu0 0.0
      %293 = vmatprep.subr.mxu0 0.0
      %294 = vmatpush1.msra.mxu0 0.0
      %295 = vmatprep.subr.mxu0 0.0
      %296 = vmatpush1.msra.mxu0 0.0
      %297 = vmatprep.subr.mxu0 0.0
      %298 = vmatpush1.msra.mxu0 0.0
      %299 = vmatprep.subr.mxu0 0.0
      %300 = vmatpush1.msra.mxu0 0.0
      %301 = vmatprep.subr.mxu0 0.0
      %302 = vmatpush1.msra.mxu0 0.0
      %303 = vmatprep.mubr.f32.mxu0 0.0
      %304 = vmatmul.mubr.f32.gmra.mrb[0].mxu0 %v234
      %v305 = vpop.f32.mrb[0].mxu0
      %v306 = vadd.f32 %v215, %v305
      %v307 = vpop.f32.mrb[0].mxu0
      %v308 = vadd.f32 %v219, %v307
      %309 = vmatprep.mubr.f32.mxu0 0.0
      %310 = vmatmul.mubr.f32.gmra.mrb[0].mxu0 %v237
      %v311 = vpop.f32.mrb[0].mxu0
      %v312 = vadd.f32 %v215, %v311
      %v313 = vpop.f32.mrb[0].mxu0
      %v314 = vadd.f32 %v219, %v313
      %315 = vdwg.mxu0
      %316 = vmatprep.subr.mxu0 %v181
      %317 = vmatpush1.msra.mxu0 %v180
      %318 = vmatprep.subr.mxu0 %v185
      %319 = vmatpush1.msra.mxu0 %v184
      %320 = vmatprep.subr.mxu0 %v189
      %321 = vmatpush1.msra.mxu0 %v188
      %322 = vmatprep.subr.mxu0 %v193
      %323 = vmatpush1.msra.mxu0 %v192
      %324 = vmatprep.subr.mxu0 %v197
      %325 = vmatpush1.msra.mxu0 %v196
      %326 = vmatprep.subr.mxu0 %v201
      %327 = vmatpush1.msra.mxu0 %v200
      %328 = vmatprep.subr.mxu0 %v205
      %329 = vmatpush1.msra.mxu0 %v204
      %330 = vmatprep.subr.mxu0 %v209
      %331 = vmatpush1.msra.mxu0 %v208
      %332 = vmatprep.subr.mxu0 0.0
      %333 = vmatpush1.msra.mxu0 0.0
      %334 = vmatprep.subr.mxu0 0.0
      %335 = vmatpush1.msra.mxu0 0.0
      %336 = vmatprep.subr.mxu0 0.0
      %337 = vmatpush1.msra.mxu0 0.0
      %338 = vmatprep.subr.mxu0 0.0
      %339 = vmatpush1.msra.mxu0 0.0
      %340 = vmatprep.subr.mxu0 0.0
      %341 = vmatpush1.msra.mxu0 0.0
      %342 = vmatprep.subr.mxu0 0.0
      %343 = vmatpush1.msra.mxu0 0.0
      %344 = vmatprep.subr.mxu0 0.0
      %345 = vmatpush1.msra.mxu0 0.0
      %346 = vmatprep.subr.mxu0 0.0
      %347 = vmatpush1.msra.mxu0 0.0
      %348 = vmatprep.subr.mxu0 0.0
      %349 = vmatpush1.msra.mxu0 0.0
      %350 = vmatprep.subr.mxu0 0.0
      %351 = vmatpush1.msra.mxu0 0.0
      %352 = vmatprep.subr.mxu0 0.0
      %353 = vmatpush1.msra.mxu0 0.0
      %354 = vmatprep.subr.mxu0 0.0
      %355 = vmatpush1.msra.mxu0 0.0
      %356 = vmatprep.subr.mxu0 0.0
      %357 = vmatpush1.msra.mxu0 0.0
      %358 = vmatprep.subr.mxu0 0.0
      %359 = vmatpush1.msra.mxu0 0.0
      %360 = vmatprep.subr.mxu0 0.0
      %361 = vmatpush1.msra.mxu0 0.0
      %362 = vmatprep.subr.mxu0 0.0
      %363 = vmatpush1.msra.mxu0 0.0
      %364 = vmatprep.subr.mxu0 0.0
      %365 = vmatpush1.msra.mxu0 0.0
      %366 = vmatprep.subr.mxu0 0.0
      %367 = vmatpush1.msra.mxu0 0.0
      %368 = vmatprep.subr.mxu0 0.0
      %369 = vmatpush1.msra.mxu0 0.0
      %370 = vmatprep.subr.mxu0 0.0
      %371 = vmatpush1.msra.mxu0 0.0
      %372 = vmatprep.subr.mxu0 0.0
      %373 = vmatpush1.msra.mxu0 0.0
      %374 = vmatprep.subr.mxu0 0.0
      %375 = vmatpush1.msra.mxu0 0.0
      %376 = vmatprep.subr.mxu0 0.0
      %377 = vmatpush1.msra.mxu0 0.0
      %378 = vmatprep.subr.mxu0 0.0
      %379 = vmatpush1.msra.mxu0 0.0
      %380 = vmatprep.mubr.f32.mxu0 0.0
      %381 = vmatmul.mubr.f32.gmra.mrb[0].mxu0 %v234
      %v382 = vpop.f32.mrb[0].mxu0
      %v383 = vadd.f32 %v223, %v382
      %v384 = vpop.f32.mrb[0].mxu0
      %v385 = vadd.f32 %v227, %v384
      %386 = vmatprep.mubr.f32.mxu0 0.0
      %387 = vmatmul.mubr.f32.gmra.mrb[0].mxu0 %v237
      %v388 = vpop.f32.mrb[0].mxu0
      %v389 = vadd.f32 %v223, %v388
      %v390 = vpop.f32.mrb[0].mxu0
      %v391 = vadd.f32 %v227, %v390
      %392 = vdwg.mxu0
      %393 = vst [vmem:[%s174] sm:$0xff] %v306
      %394 = vst [vmem:[%s174 + $0x8] sm:$0xff] %v308
      %395 = vst [vmem:[%s174 + $0x10] sm:$0xff] %v383
      %396 = vst [vmem:[%s174 + $0x18] sm:$0xff] %v385
      %397 = vst [vmem:[%s174 + $0x20] sm:$0xff] %v312
      %398 = vst [vmem:[%s174 + $0x28] sm:$0xff] %v314
      %399 = vst [vmem:[%s174 + $0x30] sm:$0xff] %v389
      %400 = vst [vmem:[%s174 + $0x38] sm:$0xff] %v391
      %s401 = smul.u32 2, %s14
      %p402 = scmp.lt.s32.totalorder %s401, 3
      %s403 = scalar_select %p402, %s401, 3
      %s404 = smul.addr %s403, 4
      %s405 = smul.addr %s404, 8
      %s406 = scalar_lea.vmem %s3, %s405
      // Predicated region
      $region33: #{upsample_forward.1} parent=31 // pred_check
        %p407 = pneg %p100
      $region34: #{upsample_forward.1} parent=31 // pred_check_branch
        %409 = sbr.rel (%p407) target = $region36
      $region35: #{upsample_forward.1} parent=31 // pred_region
        %s410 = smul.u32 2, %s14
      $region36: #{upsample_forward.1} parent=31 // pred_fallthru
        _
    $region32: #{upsample_forward.1} parent=5 // pred_fallthru
      _
    %p411 = scmp.le.s32.totalorder 2, %s9
    // Predicated region
    $region37: #{upsample_forward.1} parent=5 // pred_check
      %p412 = pneg %p411
    $region38: #{upsample_forward.1} parent=5 // pred_check_branch
      %414 = sbr.rel (%p412) target = $region40
    $region39: #{upsample_forward.1} parent=5 // pred_region
      %s415 = ssub.s32 %s9, 2
      // Predicated region
      $region41: #{upsample_forward.1} parent=39 // pred_check
        %p416 = pneg %p106
      $region42: #{upsample_forward.1} parent=39 // pred_check_branch
        %418 = sbr.rel (%p416) target = $region44
      $region43: #{upsample_forward.1} parent=39 // pred_region
        %s419 = smul.u32 2, %s15
        %p420 = scmp.lt.s32.totalorder %s419, 3
        %s421 = scalar_select %p420, %s419, 3
        %s422 = smul.addr %s421, 4
        %s423 = smul.addr %s422, 8
        %s424 = scalar_lea.vmem %s3, %s423
      $region44: #{upsample_forward.1} parent=39 // pred_fallthru
        _
    $region40: #{upsample_forward.1} parent=5 // pred_fallthru
      _
  $region6: #{upsample_forward.1} parent=0 // loop_footer
    %s13 = sadd.s32 1, %s9
  $region7: #{upsample_forward.1} parent=0 // loop_footer_branch
    %8 = sbr.rel target = $region3
  $region8: #{upsample_forward.1} parent=0 // loop_exit
    _

</llo_original>
